<compile_context>
chip_gen: v5e
topology: v5e:2x2
jax: 0.10.0
libtpu: 0.0.40
codegen_flags: <defaults>
</compile_context>

<pallas_src>
from typing import NamedTuple, Tuple

import jax
import jax.numpy as jnp
from jax.experimental import pallas as pl
from jax.experimental.pallas import tpu as pltpu


def _round_up(x: int, m: int) -> int:
    return (x + m - 1) // m * m


def _device_kind() -> str:
    try:
        return jax.devices()[0].device_kind.lower()
    except Exception:
        return ""


def _default_feature_align() -> int:
    # v6e / v7x MXUs are 2x256x256 -> 256-aligned N dims fill full passes;
    # v5e is 4x128x128 where 128 is already optimal.
    kind = _device_kind()
    return 256 if ("v6" in kind or "v7" in kind) else 128


def _vmem_caps() -> Tuple[int, int]:
    """(physical VMEM bytes, hard cap we allow for vmem_limit_bytes)."""
    try:
        phys = int(pltpu.get_tpu_info().vmem_capacity_bytes)
    except Exception:
        kind = _device_kind()
        phys = (64 << 20) if "v7" in kind else (128 << 20)
    # Leave headroom for compiler-internal scratch; never request > ~100 MiB.
    hard_cap = max(min(phys - (8 << 20), 100 << 20), 16 << 20)
    return phys, hard_cap


# ---------------------------------------------------------------------------
# One-time parameter preparation (hoisted out of the per-step forward).
# ---------------------------------------------------------------------------
class ActorParams(NamedTuple):
    flat: Tuple[jax.Array, ...]   # [W0(bf16), b0(f32), W1, b1, ...], padded
    state_size: int
    act_size: int
    out_dim: int                  # 2 * act_size (unpadded)
    out_pad: int                  # lane-aligned width of the final layer
    n_linear: int
    param_bytes: int
    flops_per_row: int


def prepare_actor_params(params, act_size, *, feature_align=None) -> ActorParams:
    """Zero-pad every layer's output feature dim (and the next layer's input
    rows) to a lane/MXU-aligned multiple, cast weights to bf16 / biases to f32.
    Call once and reuse across env steps."""
    if feature_align is None:
        feature_align = _default_feature_align()
    state_size = params[0][0].shape[0]
    out_dim = params[-1][0].shape[1]          # 2 * act_size
    flat = []
    param_bytes = 0
    flops_per_row = 0
    prev_pad = state_size                     # first layer keeps raw state width
    for (w, b) in params:
        in_dim, o = w.shape
        o_pad = _round_up(o, feature_align)
        w_p = jnp.pad(w, ((0, prev_pad - in_dim), (0, o_pad - o))).astype(jnp.bfloat16)
        b_p = jnp.pad(b, ((0, 0), (0, o_pad - o))).astype(jnp.float32)
        flat += [w_p, b_p]
        param_bytes += w_p.size * 2 + b_p.size * 4
        flops_per_row += 2 * prev_pad * o_pad
        prev_pad = o_pad
    return ActorParams(tuple(flat), state_size, act_size, out_dim, prev_pad,
                       len(params), param_bytes, flops_per_row)


# ---------------------------------------------------------------------------
# Kernel
# ---------------------------------------------------------------------------
def _make_actor_kernel(n_linear: int):
    """Ref order: state_ref, W0, b0, ..., W{n-1}, b{n-1}, out_ref.

    bf16 matmul operands, f32 MXU accumulation; bias add / ReLU in f32; the
    final layer writes one lane-dense (TB, out_pad) f32 slab."""

    def kernel(state_ref, *refs):
        param_refs = refs[: 2 * n_linear]
        out_ref = refs[2 * n_linear]

        h = state_ref[...]                                 # (TB, in) bf16
        for i in range(n_linear):
            w = param_refs[2 * i][...]                     # (in, out) bf16
            b = param_refs[2 * i + 1][...]                 # (1, out)  f32
            acc = jnp.dot(h, w, preferred_element_type=jnp.float32) + b
            if i < n_linear - 1:
                h = jnp.maximum(acc, 0.0).astype(jnp.bfloat16)
            else:
                out_ref[...] = acc.astype(out_ref.dtype)

    return kernel


def _resident_spec(shape):
    """Parameters never change across grid steps: constant index_map keeps them
    VMEM-resident; Buffered(1) drops the useless second pipeline buffer."""
    imap = lambda i: (0, 0)
    try:
        return pl.BlockSpec(shape, imap, pipeline_mode=pl.Buffered(1))
    except TypeError:   # very old jax without pipeline_mode: default buffering
        return pl.BlockSpec(shape, imap)


def _choose_batch_tiling(B: int, *, max_tile: int = 1024, sublane: int = 16):
    """Pick (TB, B_pad).  Few, large tiles; >=2 grid steps when the batch is
    big enough so both v7x TensorCores get work; TB multiple of 16 (bf16
    sublane packing), 128/256-aligned when large."""
    b_min = _round_up(max(B, 1), sublane)
    if b_min <= 2 * sublane:                 # tiny batch -> single tile
        return b_min, b_min
    tb = min(max_tile, _round_up(pl.cdiv(b_min, 2), sublane))
    if tb >= 256:
        tb = _round_up(tb, 256)
    elif tb >= 128:
        tb = _round_up(tb, 128)
    tb = min(tb, max_tile)
    return tb, _round_up(b_min, tb)


# ---------------------------------------------------------------------------
# Forward pass
# ---------------------------------------------------------------------------
def actor_forward(state, prepared: ActorParams, *, batch_tile: int = 1024):
    """state: (B, state_size) f32.  Returns (mean, log_std), each (B, act_size)
    f32, with log_std clamped to [-10, 2]."""
    B, state_size = state.shape
    assert state_size == prepared.state_size
    n = prepared.n_linear
    out_pad = prepared.out_pad

    TB, B_pad = _choose_batch_tiling(B, max_tile=batch_tile)
    grid = (B_pad // TB,)

    state_bf16 = state.astype(jnp.bfloat16)
    if B_pad != B:
        state_bf16 = jnp.pad(state_bf16, ((0, B_pad - B), (0, 0)))

    in_specs = [pl.BlockSpec((TB, state_size), lambda i: (i, 0))]
    for li in range(n):
        in_specs.append(_resident_spec(prepared.flat[2 * li].shape))
        in_specs.append(_resident_spec(prepared.flat[2 * li + 1].shape))
    out_specs = pl.BlockSpec((TB, out_pad), lambda i: (i, 0))

    # VMEM budget: single-buffered resident params + double-buffered act tiles.
    act_bytes = 2 * (TB * state_size * 2) + 2 * (TB * out_pad * 4)
    needed = prepared.param_bytes + act_bytes + (2 << 20)
    _, hard_cap = _vmem_caps()
    if needed > hard_cap:
        # TODO(synk): K-tile the weight in-dim (extra "arbitrary" grid axis +
        # f32 accumulator scratch) instead of keeping whole matrices resident.
        raise NotImplementedError(
            f"resident params need ~{needed >> 20} MiB VMEM, budget is "
            f"{hard_cap >> 20} MiB; K-tiling fallback not implemented")
    vmem_limit = int(min(max(needed + (4 << 20), 16 << 20), hard_cap))

    cost = pl.CostEstimate(
        flops=prepared.flops_per_row * B,
        transcendentals=0,
        bytes_accessed=(B_pad * state_size * 2 + prepared.param_bytes
                        + B_pad * out_pad * 4),
    )

    out_slab = pl.pallas_call(
        _make_actor_kernel(n),
        out_shape=jax.ShapeDtypeStruct((B_pad, out_pad), jnp.float32),
        grid_spec=pltpu.PrefetchScalarGridSpec(
            num_scalar_prefetch=0,
            grid=grid,
            in_specs=in_specs,
            out_specs=out_specs,
        ),
        compiler_params=pltpu.CompilerParams(
            dimension_semantics=("parallel",),
            vmem_limit_bytes=vmem_limit,
        ),
        cost_estimate=cost,
    )(state_bf16, *prepared.flat)

    out = out_slab[:B]
    mean = out[:, : prepared.act_size]
    log_std = jnp.clip(out[:, prepared.act_size: prepared.out_dim], -10.0, 2.0)
    return mean, log_std


# ---------------------------------------------------------------------------
# Synthetic init + references
# ---------------------------------------------------------------------------
def init_actor_params(key, state_size, act_size, hidden_size, hidden_layers):
    """Linear(state,h)+ReLU, [Linear(h,h)+ReLU]*(hidden_layers-1), Linear(h,2A)."""
    dims = [state_size] + [hidden_size] * hidden_layers + [2 * act_size]
    params = []
    for i in range(len(dims) - 1):
        key, kw, kb = jax.random.split(key, 3)
        scale = 1.0 / jnp.sqrt(jnp.float32(dims[i]))
        w = jax.random.uniform(kw, (dims[i], dims[i + 1]), jnp.float32, -scale, scale)
        b = jax.random.uniform(kb, (1, dims[i + 1]), jnp.float32, -scale, scale)
        params.append((w, b))
    return params


def actor_forward_ref_f32(state, params, act_size):
    """Pure f32 plain-JAX reference (matches the PyTorch module exactly)."""
    h = state
    n = len(params)
    for i, (w, b) in enumerate(params):
        h = h @ w + b
        if i < n - 1:
            h = jnp.maximum(h, 0.0)
    return h[:, :act_size], jnp.clip(h[:, act_size:], -10.0, 2.0)


def actor_forward_ref_bf16(state, params, act_size):
    """Reference mirroring the kernel's bf16-operand / f32-accumulate math."""
    h = state.astype(jnp.bfloat16)
    n = len(params)
    out = None
    for i, (w, b) in enumerate(params):
        acc = jnp.dot(h, w.astype(jnp.bfloat16),
                      preferred_element_type=jnp.float32) + b
        if i < n - 1:
            h = jnp.maximum(acc, 0.0).astype(jnp.bfloat16)
        else:
            out = acc
    return out[:, :act_size], jnp.clip(out[:, act_size:], -10.0, 2.0)


# ---------------------------------------------------------------------------
if __name__ == "__main__":
    cfg = dict(state_size=16, act_size=4, hidden_size=32, hidden_layers=2)

    key = jax.random.PRNGKey(0)
    key, k_state, k_big = jax.random.split(key, 3)
    params = init_actor_params(
        key, cfg["state_size"], cfg["act_size"], cfg["hidden_size"], cfg["hidden_layers"]
    )
    # One-time parameter prep (hoisted out of the per-step forward).
    prepared = prepare_actor_params(params, cfg["act_size"])

    def check(state):
        mean, log_std = actor_forward(state, prepared)
        jax.block_until_ready((mean, log_std))
        B = state.shape[0]
        assert mean.shape == (B, cfg["act_size"])
        assert log_std.shape == (B, cfg["act_size"])
        # vs. a reference mirroring the kernel's bf16-operand math (tight tol)
        mean_b, log_std_b = actor_forward_ref_bf16(state, params, cfg["act_size"])
        assert jnp.allclose(mean, mean_b, atol=1e-3, rtol=1e-3)
        assert jnp.allclose(log_std, log_std_b, atol=1e-3, rtol=1e-3)
        # vs. exact f32 PyTorch-equivalent reference (loose tol: bf16 operands)
        mean_f, log_std_f = actor_forward_ref_f32(state, params, cfg["act_size"])
        assert jnp.allclose(mean, mean_f, atol=5e-2, rtol=5e-2)
        assert jnp.allclose(log_std, log_std_f, atol=5e-2, rtol=5e-2)
        assert bool(jnp.all(log_std <= 2.0)) and bool(jnp.all(log_std >= -10.0))

    # Small config consistent with the module's cfg dict (batch=2, grid=(1,)).
    state_small = jax.random.normal(k_state, (2, cfg["state_size"]), jnp.float32)
    check(state_small)

    # Slightly larger batch to exercise batch padding + the multi-step grid
    # path (2 grid steps -> sharded across both TensorCores on v7x).
    state_big = jax.random.normal(k_big, (48, cfg["state_size"]), jnp.float32)
    check(state_big)

    # TODO(synk): Actor.sample() (rsample + tanh squash + log_prob correction) is a
    # stochastic method outside forward(); not implemented in the kernel.
    print("KERNEL_OK")
</pallas_src>

<mosaic_0001>
module attributes {stable_mosaic.version = 11 : i64} {
  func.func @kernel(%arg0: i32, %arg1: memref<16x16xbf16, #tpu.memory_space<vmem>>, %arg2: memref<16x128xbf16, #tpu.memory_space<vmem>>, %arg3: memref<1x128xf32, #tpu.memory_space<vmem>>, %arg4: memref<128x128xbf16, #tpu.memory_space<vmem>>, %arg5: memref<1x128xf32, #tpu.memory_space<vmem>>, %arg6: memref<128x128xbf16, #tpu.memory_space<vmem>>, %arg7: memref<1x128xf32, #tpu.memory_space<vmem>>, %arg8: memref<16x128xf32, #tpu.memory_space<vmem>>) attributes {dimension_semantics = [#tpu.dimension_semantics<parallel>], iteration_bounds = array<i64: 1>, scalar_prefetch = 0 : i64, scratch_operands = 0 : i64, tpu.core_type = #tpu.core_type<tc>, window_params = [{transform_indices = @transform_0, window_bounds = array<i64: 16, 16>}, {pipeline_mode = #tpu.pipeline_mode<synchronous>, transform_indices = @transform_1, window_bounds = array<i64: 16, 128>}, {pipeline_mode = #tpu.pipeline_mode<synchronous>, transform_indices = @transform_2, window_bounds = array<i64: 1, 128>}, {pipeline_mode = #tpu.pipeline_mode<synchronous>, transform_indices = @transform_3, window_bounds = array<i64: 128, 128>}, {pipeline_mode = #tpu.pipeline_mode<synchronous>, transform_indices = @transform_4, window_bounds = array<i64: 1, 128>}, {pipeline_mode = #tpu.pipeline_mode<synchronous>, transform_indices = @transform_5, window_bounds = array<i64: 128, 128>}, {pipeline_mode = #tpu.pipeline_mode<synchronous>, transform_indices = @transform_6, window_bounds = array<i64: 1, 128>}, {transform_indices = @transform_7, window_bounds = array<i64: 16, 128>}]} {
    %c0 = arith.constant 0 : index
    %c0_0 = arith.constant 0 : index
    %0 = vector.load %arg1[%c0, %c0_0] : memref<16x16xbf16, #tpu.memory_space<vmem>>, vector<16x16xbf16>
    %c0_1 = arith.constant 0 : index
    %c0_2 = arith.constant 0 : index
    %1 = vector.load %arg2[%c0_1, %c0_2] : memref<16x128xbf16, #tpu.memory_space<vmem>>, vector<16x128xbf16>
    %c0_3 = arith.constant 0 : index
    %c0_4 = arith.constant 0 : index
    %2 = vector.load %arg3[%c0_3, %c0_4] : memref<1x128xf32, #tpu.memory_space<vmem>>, vector<1x128xf32>
    %cst = arith.constant dense<0.000000e+00> : vector<16x128xf32>
    %3 = tpu.matmul %0, %1, %cst {dimension_numbers = #tpu.dot_dimension_numbers<[1], [0], [0], [1], [0, 0, 1, 1], [], []>} : vector<16x16xbf16>, vector<16x128xbf16>, vector<16x128xf32> -> vector<16x128xf32>
    %4 = vector.broadcast %2 : vector<1x128xf32> to vector<16x128xf32>
    %5 = arith.addf %3, %4 : vector<16x128xf32>
    %cst_5 = arith.constant 0.000000e+00 : f32
    %6 = vector.broadcast %cst_5 : f32 to vector<16x128xf32>
    %7 = arith.maximumf %5, %6 : vector<16x128xf32>
    %8 = arith.truncf %7 : vector<16x128xf32> to vector<16x128xbf16>
    %c0_6 = arith.constant 0 : index
    %c0_7 = arith.constant 0 : index
    %9 = vector.load %arg4[%c0_6, %c0_7] : memref<128x128xbf16, #tpu.memory_space<vmem>>, vector<128x128xbf16>
    %c0_8 = arith.constant 0 : index
    %c0_9 = arith.constant 0 : index
    %10 = vector.load %arg5[%c0_8, %c0_9] : memref<1x128xf32, #tpu.memory_space<vmem>>, vector<1x128xf32>
    %cst_10 = arith.constant dense<0.000000e+00> : vector<16x128xf32>
    %11 = tpu.matmul %8, %9, %cst_10 {dimension_numbers = #tpu.dot_dimension_numbers<[1], [0], [0], [1], [0, 0, 1, 1], [], []>} : vector<16x128xbf16>, vector<128x128xbf16>, vector<16x128xf32> -> vector<16x128xf32>
    %12 = vector.broadcast %10 : vector<1x128xf32> to vector<16x128xf32>
    %13 = arith.addf %11, %12 : vector<16x128xf32>
    %cst_11 = arith.constant 0.000000e+00 : f32
    %14 = vector.broadcast %cst_11 : f32 to vector<16x128xf32>
    %15 = arith.maximumf %13, %14 : vector<16x128xf32>
    %16 = arith.truncf %15 : vector<16x128xf32> to vector<16x128xbf16>
    %c0_12 = arith.constant 0 : index
    %c0_13 = arith.constant 0 : index
    %17 = vector.load %arg6[%c0_12, %c0_13] : memref<128x128xbf16, #tpu.memory_space<vmem>>, vector<128x128xbf16>
    %c0_14 = arith.constant 0 : index
    %c0_15 = arith.constant 0 : index
    %18 = vector.load %arg7[%c0_14, %c0_15] : memref<1x128xf32, #tpu.memory_space<vmem>>, vector<1x128xf32>
    %cst_16 = arith.constant dense<0.000000e+00> : vector<16x128xf32>
    %19 = tpu.matmul %16, %17, %cst_16 {dimension_numbers = #tpu.dot_dimension_numbers<[1], [0], [0], [1], [0, 0, 1, 1], [], []>} : vector<16x128xbf16>, vector<128x128xbf16>, vector<16x128xf32> -> vector<16x128xf32>
    %20 = vector.broadcast %18 : vector<1x128xf32> to vector<16x128xf32>
    %21 = arith.addf %19, %20 : vector<16x128xf32>
    %c0_17 = arith.constant 0 : index
    %c0_18 = arith.constant 0 : index
    %22 = vector.load %arg8[%c0_17, %c0_18] : memref<16x128xf32, #tpu.memory_space<vmem>>, vector<16x128xf32>
    tpu.vector_store %arg8[%c0_17, %c0_18], %21 {strides = array<i32>} : memref<16x128xf32, #tpu.memory_space<vmem>>, vector<16x128xf32>,
    return
  }
  func.func @transform_0(%arg0: i32) -> (i32, i32) {
    %c0_i32 = arith.constant 0 : i32
    %c0_i32_0 = arith.constant 0 : i32
    return %arg0, %c0_i32 : i32, i32
  }
  func.func @transform_1(%arg0: i32) -> (i32, i32) {
    %c0_i32 = arith.constant 0 : i32
    %c0_i32_0 = arith.constant 0 : i32
    %c0_i32_1 = arith.constant 0 : i32
    return %c0_i32, %c0_i32_0 : i32, i32
  }
  func.func @transform_2(%arg0: i32) -> (i32, i32) {
    %c0_i32 = arith.constant 0 : i32
    %c0_i32_0 = arith.constant 0 : i32
    %c0_i32_1 = arith.constant 0 : i32
    return %c0_i32, %c0_i32_0 : i32, i32
  }
  func.func @transform_3(%arg0: i32) -> (i32, i32) {
    %c0_i32 = arith.constant 0 : i32
    %c0_i32_0 = arith.constant 0 : i32
    %c0_i32_1 = arith.constant 0 : i32
    return %c0_i32, %c0_i32_0 : i32, i32
  }
  func.func @transform_4(%arg0: i32) -> (i32, i32) {
    %c0_i32 = arith.constant 0 : i32
    %c0_i32_0 = arith.constant 0 : i32
    %c0_i32_1 = arith.constant 0 : i32
    return %c0_i32, %c0_i32_0 : i32, i32
  }
  func.func @transform_5(%arg0: i32) -> (i32, i32) {
    %c0_i32 = arith.constant 0 : i32
    %c0_i32_0 = arith.constant 0 : i32
    %c0_i32_1 = arith.constant 0 : i32
    return %c0_i32, %c0_i32_0 : i32, i32
  }
  func.func @transform_6(%arg0: i32) -> (i32, i32) {
    %c0_i32 = arith.constant 0 : i32
    %c0_i32_0 = arith.constant 0 : i32
    %c0_i32_1 = arith.constant 0 : i32
    return %c0_i32, %c0_i32_0 : i32, i32
  }
  func.func @transform_7(%arg0: i32) -> (i32, i32) {
    %c0_i32 = arith.constant 0 : i32
    %c0_i32_0 = arith.constant 0 : i32
    return %arg0, %c0_i32 : i32, i32
  }
}

</mosaic_0001>

<llo_original>
// kernel: tpu_custom_call.1
$region0: #{tpu_custom_call.1}
  #allocation0 [shape = 'u32[]', space=smem, size = 0x4, offset = 0x4, fixed_abs, tag = 'smem constant byte address 0x4 - core index']
  #allocation1 [shape = 'u32[72,128]{1,0:T(1,128)}', space=vmem, size = 0x9000, scoped, tag = 'internal scratch']
  %s0 = inlined_call_operand.hbm [shape: bf16[16,16], index: 0, kind: input, shape index: {}]
  %s1 = inlined_call_operand.hbm [shape: bf16[16,128], index: 1, kind: input, shape index: {}]
  %s2 = inlined_call_operand.vmem [shape: f32[1,128], index: 2, kind: input, shape index: {}]
  %s3 = inlined_call_operand.hbm [shape: bf16[128,128], index: 3, kind: input, shape index: {}]
  %s4 = inlined_call_operand.vmem [shape: f32[1,128], index: 4, kind: input, shape index: {}]
  %s5 = inlined_call_operand.hbm [shape: bf16[128,128], index: 5, kind: input, shape index: {}]
  %s6 = inlined_call_operand.vmem [shape: f32[1,128], index: 6, kind: input, shape index: {}]
  %s7 = inlined_call_operand.hbm [shape: f32[16,128], index: 7, kind: output, shape index: {}]
  %s8 = sld [smem:[#allocation0]]
  $region54: #{tpu_custom_call.1} parent=0
    _
  %s10 = ssub.s32 1, %s8
  %s11 = scalar_select 0, %s10, %s8
  $region1: #{tpu_custom_call.1} parent=0
    #allocation2 [shape = 'u8[4096]{0}', space=vmem, size = 0x1000, scoped, tag = 'input window, operand 0, single buffered']
    #allocation3 [shape = 's32[1]{0}', space=sflag, size = 0x4, scoped, tag = 'scoped memory for tpu_custom_call.1']
    #allocation4 [shape = 's32[1]{0}', space=sflag, size = 0x4, scoped, tag = 'scoped memory for tpu_custom_call.1']
    #allocation5 [shape = 'u8[4096]{0}', space=vmem, size = 0x1000, scoped, tag = 'input window, operand 1, single buffered']
    #allocation6 [shape = 's32[1]{0}', space=sflag, size = 0x4, scoped, tag = 'scoped memory for tpu_custom_call.1']
    #allocation7 [shape = 'u8[32768]{0}', space=vmem, size = 0x8000, scoped, tag = 'input window, operand 3, single buffered']
    #allocation8 [shape = 'u8[32768]{0}', space=vmem, size = 0x8000, scoped, tag = 'input window, operand 5, single buffered']
    #allocation9 [shape = 's32[1]{0}', space=sflag, size = 0x4, scoped, tag = 'scoped memory for tpu_custom_call.1']
    #allocation10 [shape = 'u8[8192]{0}', space=vmem, size = 0x2000, scoped, tag = 'output window, operand 0, single buffered']
    %12 = vsyncpa [#allocation3], 0
    %13 = vsyncpa [#allocation6], 0
    %14 = vsyncpa [#allocation9], 0
    %15 = vsyncpa [#allocation4], 0
    // Predicated region
    $region2: #{tpu_custom_call.1} parent=1 // pred_check
      _
    $region3: #{tpu_custom_call.1} parent=1 // pred_check_branch
      %17 = sbr.rel (0) target = $region5
    $region4: #{tpu_custom_call.1} parent=1 // pred_region
      %19 = vsyncadd [#allocation3], 0
      %s20 = sshll.u32 %s0, 4
      %s21 = int_to_ptr.hbm [resolvable:$true] %s20
      %s22 = sshll.u32 [#allocation2], 4
      %s23 = int_to_ptr.vmem [resolvable:$true] %s22
      %28 = dma.hbm_to_vmem [thread:$0]  %s21, 128, %s23, [#allocation3], 64, 64, 4
    $region5: #{tpu_custom_call.1} parent=1 // pred_fallthru
      _
    // Predicated region
    $region6: #{tpu_custom_call.1} parent=1 // pred_check
      _
    $region7: #{tpu_custom_call.1} parent=1 // pred_check_branch
      %30 = sbr.rel (0) target = $region9
    $region8: #{tpu_custom_call.1} parent=1 // pred_region
      %32 = vsyncadd [#allocation6], 0
      %s33 = sshll.u32 %s1, 4
      %s34 = int_to_ptr.hbm [resolvable:$true] %s33
      %s35 = sshll.u32 [#allocation5], 4
      %s36 = int_to_ptr.vmem [resolvable:$true] %s35
      %41 = dma.hbm_to_vmem [thread:$0]  %s34, 128, %s36, [#allocation6], 64, 64, 4
    $region9: #{tpu_custom_call.1} parent=1 // pred_fallthru
      _
    // Predicated region
    $region10: #{tpu_custom_call.1} parent=1 // pred_check
      _
    $region11: #{tpu_custom_call.1} parent=1 // pred_check_branch
      %43 = sbr.rel (0) target = $region13
    $region12: #{tpu_custom_call.1} parent=1 // pred_region
      _
    $region13: #{tpu_custom_call.1} parent=1 // pred_fallthru
      _
    // Predicated region
    $region14: #{tpu_custom_call.1} parent=1 // pred_check
      _
    $region15: #{tpu_custom_call.1} parent=1 // pred_check_branch
      %45 = sbr.rel (0) target = $region17
    $region16: #{tpu_custom_call.1} parent=1 // pred_region
      %47 = vsyncadd [#allocation6], 0
      %s48 = sshll.u32 %s3, 4
      %s49 = int_to_ptr.hbm [resolvable:$true] %s48
      %s50 = sshll.u32 [#allocation7], 4
      %s51 = int_to_ptr.vmem [resolvable:$true] %s50
      %56 = dma.hbm_to_vmem [thread:$0]  %s49, 1024, %s51, [#allocation6], 64, 64, 4
    $region17: #{tpu_custom_call.1} parent=1 // pred_fallthru
      _
    // Predicated region
    $region18: #{tpu_custom_call.1} parent=1 // pred_check
      _
    $region19: #{tpu_custom_call.1} parent=1 // pred_check_branch
      %58 = sbr.rel (0) target = $region21
    $region20: #{tpu_custom_call.1} parent=1 // pred_region
      _
    $region21: #{tpu_custom_call.1} parent=1 // pred_fallthru
      _
    // Predicated region
    $region22: #{tpu_custom_call.1} parent=1 // pred_check
      _
    $region23: #{tpu_custom_call.1} parent=1 // pred_check_branch
      %60 = sbr.rel (0) target = $region25
    $region24: #{tpu_custom_call.1} parent=1 // pred_region
      %62 = vsyncadd [#allocation9], 0
      %s63 = sshll.u32 %s5, 4
      %s64 = int_to_ptr.hbm [resolvable:$true] %s63
      %s65 = sshll.u32 [#allocation8], 4
      %s66 = int_to_ptr.vmem [resolvable:$true] %s65
      %71 = dma.hbm_to_vmem [thread:$0]  %s64, 1024, %s66, [#allocation9], 64, 64, 4
    $region25: #{tpu_custom_call.1} parent=1 // pred_fallthru
      _
    // Predicated region
    $region26: #{tpu_custom_call.1} parent=1 // pred_check
      _
    $region27: #{tpu_custom_call.1} parent=1 // pred_check_branch
      %73 = sbr.rel (0) target = $region29
    $region28: #{tpu_custom_call.1} parent=1 // pred_region
      _
    $region29: #{tpu_custom_call.1} parent=1 // pred_fallthru
      _
    // Predicated region
    $region30: #{tpu_custom_call.1} parent=1 // pred_check
      _
    $region31: #{tpu_custom_call.1} parent=1 // pred_check_branch
      %75 = sbr.rel (0) target = $region33
    $region32: #{tpu_custom_call.1} parent=1 // pred_region
      %77 = dma.done [#allocation3], 128
    $region33: #{tpu_custom_call.1} parent=1 // pred_fallthru
      _
    // Predicated region
    $region34: #{tpu_custom_call.1} parent=1 // pred_check
      _
    $region35: #{tpu_custom_call.1} parent=1 // pred_check_branch
      %79 = sbr.rel (0) target = $region37
    $region36: #{tpu_custom_call.1} parent=1 // pred_region
      %81 = dma.done [#allocation6], 128
    $region37: #{tpu_custom_call.1} parent=1 // pred_fallthru
      _
    // Predicated region
    $region38: #{tpu_custom_call.1} parent=1 // pred_check
      _
    $region39: #{tpu_custom_call.1} parent=1 // pred_check_branch
      %83 = sbr.rel (0) target = $region41
    $region40: #{tpu_custom_call.1} parent=1 // pred_region
      %85 = dma.done [#allocation6], 1024
    $region41: #{tpu_custom_call.1} parent=1 // pred_fallthru
      _
    // Predicated region
    $region42: #{tpu_custom_call.1} parent=1 // pred_check
      _
    $region43: #{tpu_custom_call.1} parent=1 // pred_check_branch
      %87 = sbr.rel (0) target = $region45
    $region44: #{tpu_custom_call.1} parent=1 // pred_region
      %89 = dma.done [#allocation9], 1024
    $region45: #{tpu_custom_call.1} parent=1 // pred_fallthru
      _
    %v91 = vld [vmem:[#allocation2] sm:$0xf]
    %v92 = vld [vmem:[#allocation2 + $0x4] sm:$0xf]
    %v93 = vld [vmem:[#allocation5] sm:$0xf]
    %v94 = vld [vmem:[#allocation5 + $0x4] sm:$0xf]
    %v95 = vld [vmem:[%s2] sm:$0x1]
    %v97 = vperm.slane %v95, 0
    %v101 = vunpack.c.l.b16 %v91
    %v102 = vunpack.c.l.b16 %v92
    %v103 = vpack.c.b16 %v102, %v101
    %v106 = vunpack.c.l.b16 %v93
    %v107 = vunpack.c.l.b16 %v94
    %v108 = vpack.c.b16 %v107, %v106
    %vm110 = vcmask 130048
    %v112 = vsel %vm110, %v103, 0
    %114 = vmatpush.bf16.msra.mxu0 0
    %115 = vmatpush.bf16.msra.mxu0 0
    %116 = vmatpush.bf16.msra.mxu0 0
    %117 = vmatpush.bf16.msra.mxu0 0
    %118 = vmatpush.bf16.msra.mxu0 0
    %119 = vmatpush.bf16.msra.mxu0 0
    %120 = vmatpush.bf16.msra.mxu0 0
    %121 = vmatpush.bf16.msra.mxu0 %v108
    %122 = vmatmul.bf16.gmra.mxu0 %v112
    %v123 = vpop.f32.mrf.mxu0
    %v124 = vadd.f32 %v97, %v123
    %v125 = vpop.f32.mrf.mxu0
    %v126 = vadd.f32 %v97, %v125
    %127 = vdwg.mxu0
    %v128 = vmax.f32 %v124, 0.0
    %v129 = vmax.f32 %v126, 0.0
    %v130 = vpack.c.bf16 %v129, %v128
    %v131 = vld [vmem:[#allocation7] sm:$0xf]
    %v132 = vld [vmem:[#allocation7 + $0x4] sm:$0xf]
    %v133 = vld [vmem:[#allocation7 + $0x8] sm:$0xf]
    %v134 = vld [vmem:[#allocation7 + $0xc] sm:$0xf]
    %v135 = vld [vmem:[#allocation7 + $0x10] sm:$0xf]
    %v136 = vld [vmem:[#allocation7 + $0x14] sm:$0xf]
    %v137 = vld [vmem:[#allocation7 + $0x18] sm:$0xf]
    %v138 = vld [vmem:[#allocation7 + $0x1c] sm:$0xf]
    %v139 = vld [vmem:[#allocation7 + $0x20] sm:$0xf]
    %v140 = vld [vmem:[#allocation7 + $0x24] sm:$0xf]
    %v141 = vld [vmem:[#allocation7 + $0x28] sm:$0xf]
    %v142 = vld [vmem:[#allocation7 + $0x2c] sm:$0xf]
    %v143 = vld [vmem:[#allocation7 + $0x30] sm:$0xf]
    %v144 = vld [vmem:[#allocation7 + $0x34] sm:$0xf]
    %v145 = vld [vmem:[#allocation7 + $0x38] sm:$0xf]
    %v146 = vld [vmem:[#allocation7 + $0x3c] sm:$0xf]
    %v147 = vld [vmem:[%s4] sm:$0x1]
    %v149 = vperm.slane %v147, 0
    %v167 = vunpack.c.l.b16 %v131
    %v168 = vunpack.c.l.b16 %v132
    %v169 = vunpack.c.l.b16 %v133
    %v170 = vunpack.c.l.b16 %v134
    %v171 = vunpack.c.l.b16 %v135
    %v172 = vunpack.c.l.b16 %v136
    %v173 = vunpack.c.l.b16 %v137
    %v174 = vunpack.c.l.b16 %v138
    %v175 = vunpack.c.l.b16 %v139
    %v176 = vunpack.c.l.b16 %v140
    %v177 = vunpack.c.l.b16 %v141
    %v178 = vunpack.c.l.b16 %v142
    %v179 = vunpack.c.l.b16 %v143
    %v180 = vunpack.c.l.b16 %v144
    %v181 = vunpack.c.l.b16 %v145
    %v182 = vunpack.c.l.b16 %v146
    %v183 = vpack.c.b16 %v168, %v167
    %v184 = vpack.c.b16 %v170, %v169
    %v185 = vpack.c.b16 %v172, %v171
    %v186 = vpack.c.b16 %v174, %v173
    %v187 = vpack.c.b16 %v176, %v175
    %v188 = vpack.c.b16 %v178, %v177
    %v189 = vpack.c.b16 %v180, %v179
    %v190 = vpack.c.b16 %v182, %v181
    %199 = vmatpush.bf16.msra.mxu0 %v190
    %200 = vmatpush.bf16.msra.mxu0 %v189
    %201 = vmatpush.bf16.msra.mxu0 %v188
    %202 = vmatpush.bf16.msra.mxu0 %v187
    %203 = vmatpush.bf16.msra.mxu0 %v186
    %204 = vmatpush.bf16.msra.mxu0 %v185
    %205 = vmatpush.bf16.msra.mxu0 %v184
    %206 = vmatpush.bf16.msra.mxu0 %v183
    %207 = vmatmul.bf16.gmra.mxu0 %v130
    %v208 = vpop.f32.mrf.mxu0
    %v209 = vadd.f32 %v149, %v208
    %v210 = vpop.f32.mrf.mxu0
    %v211 = vadd.f32 %v149, %v210
    %212 = vdwg.mxu0
    %v213 = vmax.f32 %v209, 0.0
    %v214 = vmax.f32 %v211, 0.0
    %v215 = vpack.c.bf16 %v214, %v213
    %v216 = vld [vmem:[#allocation8] sm:$0xf]
    %v217 = vld [vmem:[#allocation8 + $0x4] sm:$0xf]
    %v218 = vld [vmem:[#allocation8 + $0x8] sm:$0xf]
    %v219 = vld [vmem:[#allocation8 + $0xc] sm:$0xf]
    %v220 = vld [vmem:[#allocation8 + $0x10] sm:$0xf]
    %v221 = vld [vmem:[#allocation8 + $0x14] sm:$0xf]
    %v222 = vld [vmem:[#allocation8 + $0x18] sm:$0xf]
    %v223 = vld [vmem:[#allocation8 + $0x1c] sm:$0xf]
    %v224 = vld [vmem:[#allocation8 + $0x20] sm:$0xf]
    %v225 = vld [vmem:[#allocation8 + $0x24] sm:$0xf]
    %v226 = vld [vmem:[#allocation8 + $0x28] sm:$0xf]
    %v227 = vld [vmem:[#allocation8 + $0x2c] sm:$0xf]
    %v228 = vld [vmem:[#allocation8 + $0x30] sm:$0xf]
    %v229 = vld [vmem:[#allocation8 + $0x34] sm:$0xf]
    %v230 = vld [vmem:[#allocation8 + $0x38] sm:$0xf]
    %v231 = vld [vmem:[#allocation8 + $0x3c] sm:$0xf]
    %v232 = vld [vmem:[%s6] sm:$0x1]
    %v234 = vperm.slane %v232, 0
    %v252 = vunpack.c.l.b16 %v216
    %v253 = vunpack.c.l.b16 %v217
    %v254 = vunpack.c.l.b16 %v218
    %v255 = vunpack.c.l.b16 %v219
    %v256 = vunpack.c.l.b16 %v220
    %v257 = vunpack.c.l.b16 %v221
    %v258 = vunpack.c.l.b16 %v222
    %v259 = vunpack.c.l.b16 %v223
    %v260 = vunpack.c.l.b16 %v224
    %v261 = vunpack.c.l.b16 %v225
    %v262 = vunpack.c.l.b16 %v226
    %v263 = vunpack.c.l.b16 %v227
    %v264 = vunpack.c.l.b16 %v228
    %v265 = vunpack.c.l.b16 %v229
    %v266 = vunpack.c.l.b16 %v230
    %v267 = vunpack.c.l.b16 %v231
    %v268 = vpack.c.b16 %v253, %v252
    %v269 = vpack.c.b16 %v255, %v254
    %v270 = vpack.c.b16 %v257, %v256
    %v271 = vpack.c.b16 %v259, %v258
    %v272 = vpack.c.b16 %v261, %v260
    %v273 = vpack.c.b16 %v263, %v262
    %v274 = vpack.c.b16 %v265, %v264
    %v275 = vpack.c.b16 %v267, %v266
    %284 = vmatpush.bf16.msra.mxu0 %v275
    %285 = vmatpush.bf16.msra.mxu0 %v274
    %286 = vmatpush.bf16.msra.mxu0 %v273
    %287 = vmatpush.bf16.msra.mxu0 %v272
    %288 = vmatpush.bf16.msra.mxu0 %v271
    %289 = vmatpush.bf16.msra.mxu0 %v270
    %290 = vmatpush.bf16.msra.mxu0 %v269
    %291 = vmatpush.bf16.msra.mxu0 %v268
    %292 = vmatmul.bf16.gmra.mxu0 %v215
    %v293 = vpop.f32.mrf.mxu0
    %v294 = vadd.f32 %v234, %v293
    %v295 = vpop.f32.mrf.mxu0
    %v296 = vadd.f32 %v234, %v295
    %297 = vdwg.mxu0
    %298 = vst [vmem:[#allocation10] sm:$0xff] %v294
    %299 = vst [vmem:[#allocation10 + $0x8] sm:$0xff] %v296
    // Predicated region
    $region46: #{tpu_custom_call.1} parent=1 // pred_check
      _
    $region47: #{tpu_custom_call.1} parent=1 // pred_check_branch
      %301 = sbr.rel (0) target = $region49
    $region48: #{tpu_custom_call.1} parent=1 // pred_region
      %303 = vsyncadd [#allocation4], 0
      %s304 = sshll.u32 [#allocation10], 4
      %s305 = int_to_ptr.vmem [resolvable:$true] %s304
      %s306 = sshll.u32 %s7, 4
      %s307 = int_to_ptr.hbm [resolvable:$true] %s306
      %312 = dma.vmem_to_hbm [thread:$0]  %s305, 256, %s307, [#allocation4], 128, 128, 8
    $region49: #{tpu_custom_call.1} parent=1 // pred_fallthru
      _
    // Predicated region
    $region50: #{tpu_custom_call.1} parent=1 // pred_check
      _
    $region51: #{tpu_custom_call.1} parent=1 // pred_check_branch
      %314 = sbr.rel (0) target = $region53
    $region52: #{tpu_custom_call.1} parent=1 // pred_region
      %316 = dma.done [#allocation4], 256
    $region53: #{tpu_custom_call.1} parent=1 // pred_fallthru
      _
    %317 = vsyncpa [#allocation3], 1
    %318 = vsyncpa [#allocation6], 1
    %319 = vsyncpa [#allocation9], 1
    %320 = vsyncpa [#allocation4], 1

</llo_original>
